<compile_context>
chip_gen: v7x
topology: tpu7x:2x2x1
jax: 0.10.0
libtpu: 0.0.40
codegen_flags: <defaults>
</compile_context>

<pallas_src>
import functools

import jax
import jax.numpy as jnp
from jax.experimental import pallas as pl
from jax.experimental.pallas import tpu as pltpu


def _round_up(n, m):
    return ((n + m - 1) // m) * m


def _tcn_kernel(x_ref, w_ref, c_ref, *rest, TL, K, dil, pad, has_res):
    # x_ref : (1, 1, TL + (K-1)*dil, C_in_eff)   bf16 input window (with conv halo)
    # w_ref : (K * C_in_eff, C_eff)              bf16 fused conv taps
    # c_ref : (3, C_eff) f32  rows: [s, t, (1-alpha) identity-residual scale]
    # rest  : (wres_ref, o_ref) if has_res else (o_ref,)
    #         wres_ref : (C_in, C_eff) bf16, already scaled by (1 - alpha)
    #         o_ref    : (1, 1, TL, C_eff) f32
    if has_res:
        wres_ref, o_ref = rest
    else:
        wres_ref = None
        (o_ref,) = rest

    x = x_ref[0, 0]                                            # (TW, C_in_eff) bf16

    # --- dilated Conv1d: one MXU matmul, contraction over K*C_in -------------------
    lhs = jnp.concatenate([x[j * dil: j * dil + TL, :] for j in range(K)], axis=-1)
    acc = jnp.dot(lhs, w_ref[...], preferred_element_type=jnp.float32)  # (TL, C_eff)

    # --- fused  alpha * ReLU(BN(conv))  ==  max(acc*s + t, 0)  (alpha >= 0) ---------
    y = jnp.maximum(acc * c_ref[0:1, :] + c_ref[1:2, :], 0.0)

    # --- residual branch, (1-alpha) already folded in -------------------------------
    x_center = x[pad: pad + TL, :]
    if has_res:
        res = jnp.dot(x_center, wres_ref[...], preferred_element_type=jnp.float32)
    else:
        res = x_center.astype(jnp.float32) * c_ref[2:3, :]

    o_ref[0, 0] = y + res


def tcn_block(x, params, *, kernel_size, dilation=1, eps=1e-5, tl=512):
    """x: (B, C_in, L) float32 (PyTorch NCL). Returns (B, C_out, L) float32."""
    B, C_in, L = x.shape
    w = params["conv_w"]                     # (C_out, C_in, K)  PyTorch layout
    C_out = w.shape[0]
    K = kernel_size
    halo = (K - 1) * dilation
    # Same-length output (and hence the residual add) requires (K-1)*dilation even,
    # exactly like the original PyTorch module.
    assert halo % 2 == 0, "(kernel_size-1)*dilation must be even for 'same' padding"
    pad = halo // 2
    has_res = C_in != C_out

    # ---- L tiling ------------------------------------------------------------------
    TL = max(8, min(int(tl), _round_up(L, 8)))
    nL = pl.cdiv(L, TL)
    L_t = nL * TL
    TW = TL + halo

    # ---- channel (lane) padding: only when relative inflation is small --------------
    C_pad = _round_up(C_out, 128)
    C_eff = C_pad if (C_pad - C_out) <= max(C_out // 4, 0) else C_out
    C_in_eff = C_in if has_res else C_eff      # identity residual must share padding

    f32 = jnp.float32
    # ---- fold conv bias + BN + alpha into per-channel constants ---------------------
    alpha = jnp.clip(params["alpha"].astype(f32), 0.0, 1.0)
    g = params["bn_gamma"].astype(f32) * jax.lax.rsqrt(params["bn_var"].astype(f32) + eps)
    s = alpha * g
    t = alpha * (params["bn_beta"].astype(f32)
                 + (params["conv_b"].astype(f32) - params["bn_mean"].astype(f32)) * g)
    if has_res:
        r = jnp.zeros((C_out,), f32)                       # unused row
    else:
        r = jnp.full((C_out,), 1.0, f32) * (1.0 - alpha)   # identity-residual scale
    consts = jnp.stack([s, t, r], axis=0)                  # (3, C_out)
    consts = jnp.pad(consts, ((0, 0), (0, C_eff - C_out)))

    # ---- conv weights: (C_out, C_in, K) -> (K*C_in_eff, C_eff), bf16 ----------------
    w_t = jnp.transpose(w, (2, 1, 0))                      # (K, C_in, C_out)
    w_t = jnp.pad(w_t, ((0, 0), (0, C_in_eff - C_in), (0, C_eff - C_out)))
    w_kic = w_t.reshape(K * C_in_eff, C_eff).astype(jnp.bfloat16)

    inputs = []
    in_specs = []

    # ---- input windows with conv halo, bf16, channels-last --------------------------
    x_blc = jnp.transpose(x, (0, 2, 1)).astype(jnp.bfloat16)          # (B, L, C_in)
    x_blc = jnp.pad(x_blc, ((0, 0), (0, 0), (0, C_in_eff - C_in)))
    x_full = jnp.pad(x_blc, ((0, 0), (pad, (L_t - L) + pad), (0, 0)))  # (B, L_t+halo, C)
    # Overlapping windows are materialized in the wrapper (halo/TL extra HBM traffic
    # is negligible); keeps BlockSpecs plain Blocked with full-extent trailing dims.
    x_win = jnp.stack([x_full[:, l * TL: l * TL + TW, :] for l in range(nL)], axis=1)

    inputs.append(x_win)                                   # (B, nL, TW, C_in_eff)
    in_specs.append(pl.BlockSpec((1, 1, TW, C_in_eff), lambda b, l: (b, l, 0, 0)))
    inputs.append(w_kic)
    in_specs.append(pl.BlockSpec((K * C_in_eff, C_eff), lambda b, l: (0, 0)))
    inputs.append(consts)
    in_specs.append(pl.BlockSpec((3, C_eff), lambda b, l: (0, 0)))

    if has_res:
        wres = jnp.transpose(params["res_w"][:, :, 0], (1, 0))        # (C_in, C_out)
        wres = (1.0 - alpha) * wres
        wres = jnp.pad(wres, ((0, 0), (0, C_eff - C_out))).astype(jnp.bfloat16)
        inputs.append(wres)
        in_specs.append(pl.BlockSpec((C_in, C_eff), lambda b, l: (0, 0)))

    kernel = functools.partial(_tcn_kernel, TL=TL, K=K, dil=dilation, pad=pad,
                               has_res=has_res)

    out = pl.pallas_call(
        kernel,
        out_shape=jax.ShapeDtypeStruct((B, nL, TL, C_eff), jnp.float32),
        grid_spec=pltpu.PrefetchScalarGridSpec(
            num_scalar_prefetch=0,
            grid=(B, nL),
            in_specs=in_specs,
            out_specs=pl.BlockSpec((1, 1, TL, C_eff), lambda b, l: (b, l, 0, 0)),
        ),
        compiler_params=pltpu.CompilerParams(
            dimension_semantics=("parallel", "parallel"),
            vmem_limit_bytes=32 * 1024 * 1024,
        ),
    )(*inputs)

    out = out.reshape(B, L_t, C_eff)[:, :L, :C_out]        # drop L / channel padding
    return jnp.transpose(out, (0, 2, 1))                   # back to (B, C_out, L)


def reference(x, params, *, kernel_size, dilation=1, eps=1e-5):
    """Pure-JAX f32 reference (inference-mode semantics), independent conv impl."""
    pad = (kernel_size - 1) * dilation // 2
    y = jax.lax.conv_general_dilated(
        x, params["conv_w"], window_strides=(1,), padding=[(pad, pad)],
        rhs_dilation=(dilation,), dimension_numbers=("NCH", "OIH", "NCH"))
    y = y + params["conv_b"][None, :, None]
    inv = jax.lax.rsqrt(params["bn_var"] + eps)
    y = (y - params["bn_mean"][None, :, None]) * (inv * params["bn_gamma"])[None, :, None]
    y = y + params["bn_beta"][None, :, None]
    y = jnp.maximum(y, 0.0)
    if params.get("res_w") is not None:
        residual = jax.lax.conv_general_dilated(
            x, params["res_w"], window_strides=(1,), padding=[(0, 0)],
            dimension_numbers=("NCH", "OIH", "NCH"))
    else:
        residual = x
    alpha = jnp.clip(params["alpha"], 0.0, 1.0)
    return alpha * y + (1.0 - alpha) * residual


def _make_params(key, C_in, C_out, K, with_res):
    ks = jax.random.split(key, 8)
    return {
        "conv_w":   0.2 * jax.random.normal(ks[0], (C_out, C_in, K), jnp.float32),
        "conv_b":   0.1 * jax.random.normal(ks[1], (C_out,), jnp.float32),
        "bn_gamma": 1.0 + 0.1 * jax.random.normal(ks[2], (C_out,), jnp.float32),
        "bn_beta":  0.1 * jax.random.normal(ks[3], (C_out,), jnp.float32),
        "bn_mean":  0.1 * jax.random.normal(ks[4], (C_out,), jnp.float32),
        "bn_var":   jnp.abs(1.0 + 0.1 * jax.random.normal(ks[5], (C_out,), jnp.float32)),
        "alpha":    jnp.asarray(0.6, jnp.float32),
        "res_w":    (0.2 * jax.random.normal(ks[6], (C_out, C_in, 1), jnp.float32)
                     if with_res else None),
    }, ks[7]


if __name__ == "__main__":
    root = jax.random.PRNGKey(0)
    k1, k2 = jax.random.split(root, 2)

    # case 1: 1x1-projection residual (C_in != C_out), dilation 1, two L-tiles
    B, C_in, C_out, L, K, dil = 2, 4, 8, 16, 3, 1
    params, kx = _make_params(k1, C_in, C_out, K, with_res=True)
    x = jax.random.normal(kx, (B, C_in, L), jnp.float32)
    out = jax.block_until_ready(tcn_block(x, params, kernel_size=K, dilation=dil, tl=8))
    ref = reference(x, params, kernel_size=K, dilation=dil)
    assert out.shape == (B, C_out, L)
    err1 = float(jnp.max(jnp.abs(out - ref)))
    assert err1 < 5e-2, err1                      # bf16 matmul inputs, f32 accumulation

    # case 2: identity residual (C_in == C_out), dilation 2
    B2, C2, L2, K2, dil2 = 2, 8, 16, 3, 2
    params2, kx2 = _make_params(k2, C2, C2, K2, with_res=False)
    x2 = jax.random.normal(kx2, (B2, C2, L2), jnp.float32)
    out2 = jax.block_until_ready(tcn_block(x2, params2, kernel_size=K2, dilation=dil2, tl=8))
    ref2 = reference(x2, params2, kernel_size=K2, dilation=dil2)
    assert out2.shape == (B2, C2, L2)
    err2 = float(jnp.max(jnp.abs(out2 - ref2)))
    assert err2 < 5e-2, err2

    print("KERNEL_OK")
</pallas_src>

<mosaic_0001>
module attributes {stable_mosaic.version = 11 : i64} {
  func.func @_tcn_kernel(%arg0: i32, %arg1: i32, %arg2: memref<1x1x10x4xbf16, #tpu.memory_space<vmem>>, %arg3: memref<12x8xbf16, #tpu.memory_space<vmem>>, %arg4: memref<3x8xf32, #tpu.memory_space<vmem>>, %arg5: memref<4x8xbf16, #tpu.memory_space<vmem>>, %arg6: memref<1x1x8x8xf32, #tpu.memory_space<vmem>>) attributes {dimension_semantics = [#tpu.dimension_semantics<parallel>, #tpu.dimension_semantics<parallel>], iteration_bounds = array<i64: 2, 2>, scalar_prefetch = 0 : i64, scratch_operands = 0 : i64, tpu.core_type = #tpu.core_type<tc>, window_params = [{transform_indices = @transform_0, window_bounds = array<i64: 1, 1, 10, 4>}, {pipeline_mode = #tpu.pipeline_mode<synchronous>, transform_indices = @transform_1, window_bounds = array<i64: 12, 8>}, {pipeline_mode = #tpu.pipeline_mode<synchronous>, transform_indices = @transform_2, window_bounds = array<i64: 3, 8>}, {pipeline_mode = #tpu.pipeline_mode<synchronous>, transform_indices = @transform_3, window_bounds = array<i64: 4, 8>}, {transform_indices = @transform_4, window_bounds = array<i64: 1, 1, 8, 8>}]} {
    %c0 = arith.constant 0 : index
    %c0_0 = arith.constant 0 : index
    %c0_1 = arith.constant 0 : index
    %c0_2 = arith.constant 0 : index
    %0 = vector.load %arg2[%c0, %c0_0, %c0_1, %c0_2] : memref<1x1x10x4xbf16, #tpu.memory_space<vmem>>, vector<1x1x10x4xbf16>
    %1 = vector.shape_cast %0 : vector<1x1x10x4xbf16> to vector<10x4xbf16>
    %2 = vector.extract_strided_slice %1 {offsets = [0, 0], sizes = [8, 4], strides = [1, 1]} : vector<10x4xbf16> to vector<8x4xbf16>
    %3 = vector.extract_strided_slice %1 {offsets = [1, 0], sizes = [8, 4], strides = [1, 1]} : vector<10x4xbf16> to vector<8x4xbf16>
    %4 = vector.extract_strided_slice %1 {offsets = [2, 0], sizes = [8, 4], strides = [1, 1]} : vector<10x4xbf16> to vector<8x4xbf16>
    %5 = tpu.concatenate %2, %3, %4 in 1 : vector<8x4xbf16>, vector<8x4xbf16>, vector<8x4xbf16> -> vector<8x12xbf16>
    %c0_3 = arith.constant 0 : index
    %c0_4 = arith.constant 0 : index
    %6 = vector.load %arg3[%c0_3, %c0_4] : memref<12x8xbf16, #tpu.memory_space<vmem>>, vector<12x8xbf16>
    %cst = arith.constant dense<0.000000e+00> : vector<8x8xf32>
    %7 = tpu.matmul %5, %6, %cst {dimension_numbers = #tpu.dot_dimension_numbers<[1], [0], [0], [1], [0, 0, 1, 1], [], []>} : vector<8x12xbf16>, vector<12x8xbf16>, vector<8x8xf32> -> vector<8x8xf32>
    %c0_5 = arith.constant 0 : index
    %c0_6 = arith.constant 0 : index
    %8 = vector.load %arg4[%c0_5, %c0_6] : memref<3x8xf32, #tpu.memory_space<vmem>>, vector<1x8xf32>
    %9 = vector.broadcast %8 : vector<1x8xf32> to vector<8x8xf32>
    %10 = arith.mulf %7, %9 : vector<8x8xf32>
    %c1 = arith.constant 1 : index
    %c0_7 = arith.constant 0 : index
    %11 = vector.load %arg4[%c1, %c0_7] : memref<3x8xf32, #tpu.memory_space<vmem>>, vector<1x8xf32>
    %12 = vector.broadcast %11 : vector<1x8xf32> to vector<8x8xf32>
    %13 = arith.addf %10, %12 : vector<8x8xf32>
    %cst_8 = arith.constant 0.000000e+00 : f32
    %14 = vector.broadcast %cst_8 : f32 to vector<8x8xf32>
    %15 = arith.maximumf %13, %14 : vector<8x8xf32>
    %16 = vector.extract_strided_slice %1 {offsets = [1, 0], sizes = [8, 4], strides = [1, 1]} : vector<10x4xbf16> to vector<8x4xbf16>
    %c0_9 = arith.constant 0 : index
    %c0_10 = arith.constant 0 : index
    %17 = vector.load %arg5[%c0_9, %c0_10] : memref<4x8xbf16, #tpu.memory_space<vmem>>, vector<4x8xbf16>
    %cst_11 = arith.constant dense<0.000000e+00> : vector<8x8xf32>
    %18 = tpu.matmul %16, %17, %cst_11 {dimension_numbers = #tpu.dot_dimension_numbers<[1], [0], [0], [1], [0, 0, 1, 1], [], []>} : vector<8x4xbf16>, vector<4x8xbf16>, vector<8x8xf32> -> vector<8x8xf32>
    %19 = arith.addf %15, %18 : vector<8x8xf32>
    %c0_12 = arith.constant 0 : index
    %c0_13 = arith.constant 0 : index
    %c0_14 = arith.constant 0 : index
    %c0_15 = arith.constant 0 : index
    %20 = vector.load %arg6[%c0_12, %c0_13, %c0_14, %c0_15] : memref<1x1x8x8xf32, #tpu.memory_space<vmem>>, vector<1x1x8x8xf32>
    %21 = vector.shape_cast %20 : vector<1x1x8x8xf32> to vector<8x8xf32>
    %22 = vector.shape_cast %19 : vector<8x8xf32> to vector<1x1x8x8xf32>
    tpu.vector_store %arg6[%c0_12, %c0_13, %c0_14, %c0_15], %22 {strides = array<i32>} : memref<1x1x8x8xf32, #tpu.memory_space<vmem>>, vector<1x1x8x8xf32>,
    return
  }
  func.func @transform_0(%arg0: i32, %arg1: i32) -> (i32, i32, i32, i32) {
    %c0_i32 = arith.constant 0 : i32
    %c0_i32_0 = arith.constant 0 : i32
    %c0_i32_1 = arith.constant 0 : i32
    return %arg0, %arg1, %c0_i32, %c0_i32_0 : i32, i32, i32, i32
  }
  func.func @transform_1(%arg0: i32, %arg1: i32) -> (i32, i32) {
    %c0_i32 = arith.constant 0 : i32
    %c0_i32_0 = arith.constant 0 : i32
    %c0_i32_1 = arith.constant 0 : i32
    return %c0_i32, %c0_i32_0 : i32, i32
  }
  func.func @transform_2(%arg0: i32, %arg1: i32) -> (i32, i32) {
    %c0_i32 = arith.constant 0 : i32
    %c0_i32_0 = arith.constant 0 : i32
    %c0_i32_1 = arith.constant 0 : i32
    return %c0_i32, %c0_i32_0 : i32, i32
  }
  func.func @transform_3(%arg0: i32, %arg1: i32) -> (i32, i32) {
    %c0_i32 = arith.constant 0 : i32
    %c0_i32_0 = arith.constant 0 : i32
    %c0_i32_1 = arith.constant 0 : i32
    return %c0_i32, %c0_i32_0 : i32, i32
  }
  func.func @transform_4(%arg0: i32, %arg1: i32) -> (i32, i32, i32, i32) {
    %c0_i32 = arith.constant 0 : i32
    %c0_i32_0 = arith.constant 0 : i32
    %c0_i32_1 = arith.constant 0 : i32
    return %arg0, %arg1, %c0_i32, %c0_i32_0 : i32, i32, i32, i32
  }
}

</mosaic_0001>

<llo_original>
// kernel: tpu_custom_call.1
$region0: #{tpu_custom_call.1}
  #allocation0 [shape = 'u32[]', space=smem, size = 0x4, offset = 0x4, fixed_abs, tag = 'smem constant byte address 0x4 - core index']
  #allocation1 [shape = 'u32[144,128]{1,0:T(1,128)}', space=vmem, size = 0x12000, scoped, tag = 'internal scratch']
  %s0 = inlined_call_operand.vmem [shape: bf16[2,2,10,4], index: 0, kind: input, shape index: {}]
  %s1 = inlined_call_operand.vmem [shape: bf16[12,8], index: 1, kind: input, shape index: {}]
  %s2 = inlined_call_operand.vmem [shape: f32[3,8], index: 2, kind: input, shape index: {}]
  %s3 = inlined_call_operand.vmem [shape: bf16[4,8], index: 3, kind: input, shape index: {}]
  %s4 = inlined_call_operand.hbm [shape: f32[2,2,8,8], index: 4, kind: output, shape index: {}]
  %s5 = sld [smem:[#allocation0]]
  $region49: #{tpu_custom_call.1} parent=0
    _
  %s7 = ssub.s32 1, %s5
  %s8 = scalar_select 0, %s7, %s5
  $region1: #{tpu_custom_call.1} parent=0
    #allocation2 [shape = 'u8[8192]{0}', space=vmem, size = 0x2000, scoped, tag = 'output window, operand 0']
    #allocation3 [shape = 's32[2]{0}', space=sflag, size = 0x8, scoped, tag = 'scoped memory for tpu_custom_call.1']
    %9 = vsyncpa [#allocation3], 0
    %s10 = scalar_lea.sflag [#allocation3], 1
    %11 = vsyncpa %s10, 0
    loop: start=0, step=1, limit=6
    $region2: #{tpu_custom_call.1} parent=1 // loop_pre_header
      _
    $region3: #{tpu_custom_call.1} parent=1 // loop_header
      %s13 = sphi 0, %s17
      %p14 = scmp.ge.s32.totalorder %s13, 6
      %s20 = sphi 0, %s32
      %s21 = sphi 0, %s28
      %s22 = sphi 0, %s20
      %s23 = sphi 0, %s21
      %s24 = sphi 0, %s22
      %s25 = sphi 0, %s23
      %s37 = sphi 0, %s39
      %s40 = sphi 0, %s37
      %s41 = sphi 0, %s40
      %s57 = sphi 0, %s41
      %s61 = sphi 0, %s61
      %s63 = sphi 0, %s61
      %s64 = sphi 0, %s63
      %s78 = sphi 0, %s64
      %s82 = sphi 0, %s82
      %s84 = sphi 0, %s82
      %s85 = sphi 0, %s84
      %s99 = sphi 0, %s85
      %s103 = sphi 0, %s103
      %s105 = sphi 0, %s103
      %s106 = sphi 0, %s105
      %s120 = sphi 0, %s106
      %s128 = sphi 0, %s130
      %s131 = sphi 0, %s128
      %s132 = sphi 0, %s131
      %s148 = sphi 0, %s132
    $region4: #{tpu_custom_call.1} parent=1 // loop_header_branch
      %16 = sbr.rel (%p14) target = $region8
    $region5: #{tpu_custom_call.1} parent=1 // loop_body
      %s18 = ssub.s32 %s13, 1
      %s19 = ssub.s32 %s13, 2
      %s26 = sadd.s32 1, %s21
      %p27 = scmp.ge.s32.totalorder %s26, 2
      %s28 = scalar_select %p27, 0, %s26
      %s29 = sadd.s32 1, %s20
      %s30 = scalar_select %p27, %s29, %s20
      %p31 = scmp.ge.s32.totalorder %s30, 2
      %s32 = scalar_select %p31, 0, %s30
      %s33 = ssub.s32 %s20, %s32
      %s34 = ssub.s32 %s21, %s28
      %s35 = sor.u32 %s33, %s34
      %p36 = scmp.eq.s32.totalorder %s35, 0
      %s38 = sadd.s32 %s37, 1
      %s39 = scalar_select %p36, %s37, %s38
      %p42 = pneg %p36
      %p43 = scmp.eq.s32.totalorder %s13, 3
      %p44 = por %p42, %p43
      %p45 = scmp.ne.s32.totalorder %s37, %s40
      %p46 = scmp.eq.s32.totalorder %s13, 0
      %p47 = por %p45, %p46
      %p48 = scmp.ne.s32.totalorder %s37, %s40
      %p49 = scmp.eq.s32.totalorder %s18, 3
      %p50 = por %p48, %p49
      %p51 = scmp.ne.s32.totalorder %s40, %s41
      %p52 = scmp.eq.s32.totalorder %s18, 0
      %p53 = por %p51, %p52
      %p54 = scmp.ne.s32.totalorder %s40, %s41
      %p55 = scmp.eq.s32.totalorder %s19, 3
      %p56 = por %p54, %p55
      %p58 = scmp.ne.s32.totalorder %s41, %s57
      %p59 = scmp.eq.s32.totalorder %s19, 0
      %p60 = por %p58, %p59
      %s62 = sadd.s32 %s61, 1
      %p65 = scmp.eq.s32.totalorder %s13, 3
      %p66 = scmp.ne.s32.totalorder %s61, %s63
      %p67 = scmp.eq.s32.totalorder %s13, 0
      %p68 = por %p66, %p67
      %p69 = scmp.ne.s32.totalorder %s61, %s63
      %p70 = scmp.eq.s32.totalorder %s18, 3
      %p71 = por %p69, %p70
      %p72 = scmp.ne.s32.totalorder %s63, %s64
      %p73 = scmp.eq.s32.totalorder %s18, 0
      %p74 = por %p72, %p73
      %p75 = scmp.ne.s32.totalorder %s63, %s64
      %p76 = scmp.eq.s32.totalorder %s19, 3
      %p77 = por %p75, %p76
      %p79 = scmp.ne.s32.totalorder %s64, %s78
      %p80 = scmp.eq.s32.totalorder %s19, 0
      %p81 = por %p79, %p80
      %s83 = sadd.s32 %s82, 1
      %p86 = scmp.eq.s32.totalorder %s13, 3
      %p87 = scmp.ne.s32.totalorder %s82, %s84
      %p88 = scmp.eq.s32.totalorder %s13, 0
      %p89 = por %p87, %p88
      %p90 = scmp.ne.s32.totalorder %s82, %s84
      %p91 = scmp.eq.s32.totalorder %s18, 3
      %p92 = por %p90, %p91
      %p93 = scmp.ne.s32.totalorder %s84, %s85
      %p94 = scmp.eq.s32.totalorder %s18, 0
      %p95 = por %p93, %p94
      %p96 = scmp.ne.s32.totalorder %s84, %s85
      %p97 = scmp.eq.s32.totalorder %s19, 3
      %p98 = por %p96, %p97
      %p100 = scmp.ne.s32.totalorder %s85, %s99
      %p101 = scmp.eq.s32.totalorder %s19, 0
      %p102 = por %p100, %p101
      %s104 = sadd.s32 %s103, 1
      %p107 = scmp.eq.s32.totalorder %s13, 3
      %p108 = scmp.ne.s32.totalorder %s103, %s105
      %p109 = scmp.eq.s32.totalorder %s13, 0
      %p110 = por %p108, %p109
      %p111 = scmp.ne.s32.totalorder %s103, %s105
      %p112 = scmp.eq.s32.totalorder %s18, 3
      %p113 = por %p111, %p112
      %p114 = scmp.ne.s32.totalorder %s105, %s106
      %p115 = scmp.eq.s32.totalorder %s18, 0
      %p116 = por %p114, %p115
      %p117 = scmp.ne.s32.totalorder %s105, %s106
      %p118 = scmp.eq.s32.totalorder %s19, 3
      %p119 = por %p117, %p118
      %p121 = scmp.ne.s32.totalorder %s106, %s120
      %p122 = scmp.eq.s32.totalorder %s19, 0
      %p123 = por %p121, %p122
      %s124 = ssub.s32 %s20, %s32
      %s125 = ssub.s32 %s21, %s28
      %s126 = sor.u32 %s124, %s125
      %p127 = scmp.eq.s32.totalorder %s126, 0
      %s129 = sadd.s32 %s128, 1
      %s130 = scalar_select %p127, %s128, %s129
      %p133 = pneg %p127
      %p134 = scmp.eq.s32.totalorder %s13, 3
      %p135 = por %p133, %p134
      %p136 = scmp.ne.s32.totalorder %s128, %s131
      %p137 = scmp.eq.s32.totalorder %s13, 0
      %p138 = por %p136, %p137
      %p139 = scmp.ne.s32.totalorder %s128, %s131
      %p140 = scmp.eq.s32.totalorder %s18, 3
      %p141 = por %p139, %p140
      %p142 = scmp.ne.s32.totalorder %s131, %s132
      %p143 = scmp.eq.s32.totalorder %s18, 0
      %p144 = por %p142, %p143
      %p145 = scmp.ne.s32.totalorder %s131, %s132
      %p146 = scmp.eq.s32.totalorder %s19, 3
      %p147 = por %p145, %p146
      %p149 = scmp.ne.s32.totalorder %s132, %s148
      %p150 = scmp.eq.s32.totalorder %s19, 0
      %p151 = por %p149, %p150
      %p152 = scmp.le.s32.totalorder 1, %s13
      %p153 = scmp.lt.s32.totalorder %s13, 5
      %p154 = pnand %p152, %p153
      %p155 = pneg %p154
      // Predicated region
      $region9: #{tpu_custom_call.1} parent=5 // pred_check
        _
      $region10: #{tpu_custom_call.1} parent=5 // pred_check_branch
        %157 = sbr.rel (%p154) target = $region12
      $region11: #{tpu_custom_call.1} parent=5 // pred_region
        %s158 = ssub.s32 %s13, 1
        // Predicated region
        $region13: #{tpu_custom_call.1} parent=11 // pred_check
          %p159 = pneg %p74
        $region14: #{tpu_custom_call.1} parent=11 // pred_check_branch
          %161 = sbr.rel (%p159) target = $region16
        $region15: #{tpu_custom_call.1} parent=11 // pred_region
          _
        $region16: #{tpu_custom_call.1} parent=11 // pred_fallthru
          _
        // Predicated region
        $region17: #{tpu_custom_call.1} parent=11 // pred_check
          %p162 = pneg %p95
        $region18: #{tpu_custom_call.1} parent=11 // pred_check_branch
          %164 = sbr.rel (%p162) target = $region20
        $region19: #{tpu_custom_call.1} parent=11 // pred_region
          _
        $region20: #{tpu_custom_call.1} parent=11 // pred_fallthru
          _
        // Predicated region
        $region21: #{tpu_custom_call.1} parent=11 // pred_check
          %p165 = pneg %p116
        $region22: #{tpu_custom_call.1} parent=11 // pred_check_branch
          %167 = sbr.rel (%p165) target = $region24
        $region23: #{tpu_custom_call.1} parent=11 // pred_region
          _
        $region24: #{tpu_custom_call.1} parent=11 // pred_fallthru
          _
      $region12: #{tpu_custom_call.1} parent=5 // pred_fallthru
        _
      %p168 = scmp.lt.s32.totalorder %s13, 4
      // Predicated region
      $region25: #{tpu_custom_call.1} parent=5 // pred_check
        %p169 = pneg %p168
      $region26: #{tpu_custom_call.1} parent=5 // pred_check_branch
        %171 = sbr.rel (%p169) target = $region28
      $region27: #{tpu_custom_call.1} parent=5 // pred_region
        // Predicated region
        $region29: #{tpu_custom_call.1} parent=27 // pred_check
          %p172 = pneg %p47
        $region30: #{tpu_custom_call.1} parent=27 // pred_check_branch
          %174 = sbr.rel (%p172) target = $region32
        $region31: #{tpu_custom_call.1} parent=27 // pred_region
          %p175 = scmp.lt.s32.totalorder %s20, 1
          %s176 = scalar_select %p175, %s20, 1
          %p177 = scmp.lt.s32.totalorder %s21, 1
          %s178 = scalar_select %p177, %s21, 1
          %s179 = smul.addr %s178, 2
          %s180 = smul.addr %s176, 4
          %s181 = sadd.s32 %s179, %s180
          %s182 = smul.addr %s181, 4
          %s183 = scalar_lea.vmem %s0, %s182
        $region32: #{tpu_custom_call.1} parent=27 // pred_fallthru
          _
      $region28: #{tpu_custom_call.1} parent=5 // pred_fallthru
        _
      %p184 = scmp.le.s32.totalorder 1, %s13
      %p185 = scmp.lt.s32.totalorder %s13, 5
      %p186 = pnand %p184, %p185
      %p187 = pneg %p186
      // Predicated region
      $region33: #{tpu_custom_call.1} parent=5 // pred_check
        _
      $region34: #{tpu_custom_call.1} parent=5 // pred_check_branch
        %189 = sbr.rel (%p186) target = $region36
      $region35: #{tpu_custom_call.1} parent=5 // pred_region
        %s190 = ssub.s32 %s13, 1
        %p191 = scmp.lt.s32.totalorder %s22, 1
        %s192 = scalar_select %p191, %s22, 1
        %p193 = scmp.lt.s32.totalorder %s23, 1
        %s194 = scalar_select %p193, %s23, 1
        %s195 = smul.addr %s194, 2
        %s196 = smul.addr %s192, 4
        %s197 = sadd.s32 %s195, %s196
        %s198 = smul.addr %s197, 4
        %s199 = scalar_lea.vmem %s0, %s198
        %p200 = pneg %p53
        %p201 = pneg %p50
        %p202 = pneg %p74
        %p203 = pneg %p71
        %p204 = pneg %p95
        %p205 = pneg %p92
        %p206 = pneg %p116
        %p207 = pneg %p113
        %p208 = pneg %p144
        %p209 = pneg %p141
        %s210 = sand.u32 %s131, 1
        %s211 = scalar_lea.sflag [#allocation3], %s210
        %s212 = sand.u32 %s131, 1
        %s213 = smul.addr %s212, 8
        %s214 = scalar_lea.vmem [#allocation2], %s213
        %p215 = scmp.lt.s32.totalorder %s22, 1
        %s216 = scalar_select %p215, %s22, 1
        %p217 = scmp.lt.s32.totalorder %s23, 1
        %s218 = scalar_select %p217, %s23, 1
        %s219 = smul.addr %s218, 2
        %s220 = smul.addr %s216, 4
        %s221 = sadd.s32 %s219, %s220
        %s222 = smul.addr %s221, 4
        %s223 = scalar_lea.vmem %s0, %s222
        %v225 = vld [vmem:[%s223] sm:$0xf]
        %v226 = vld [vmem:[%s223 + $0x4] sm:$0x1]
        %v229 = vunpack.c.l.b16 %v225
        %v230 = vunpack.c.l.b16 %v226
        %v231 = vpack.c.b16 %v230, %v229
        %v233 = vshrl.u32 %v231, 16
        %v235 = vshll.u32 %v231, 16
        %v237 = vrot.slane %v235, 1
        %v238 = vor.u32 %v233, %v237
        %239 = vrot.lane.b32.xlu0 %v238, 4
        %v240 = vpop.permute.xlu0 %239
        %v241 = vrot.slane %v231, 1
        %242 = vrot.lane.b32.xlu0 %v241, 8
        %v243 = vpop.permute.xlu0 %242
        %vm244 = vcmask 31744
        %v247 = vsel %vm244, %v225, %v240
        %vm248 = vcmask 64512
        %v250 = vsel %vm248, %v247, %v243
        %v251 = vld [vmem:[%s1] sm:$0xf]
        %v252 = vld [vmem:[%s1 + $0x4] sm:$0x3]
        %v255 = vunpack.c.l.b16 %v251
        %v256 = vunpack.c.l.b16 %v252
        %v257 = vpack.c.b16 %v256, %v255
        %vm258 = vcmask 97280
        %v259 = vsel %vm258, %v250, 0
        %vm261 = vcmask 1045504
        %v263 = vsel %vm261, %v257, 0
        %265 = vmatprep.subr.bf16.mxu0 0
        %266 = vmatpush1.bf16.msra.mxu0 %v263
        %267 = vmatprep.subr.bf16.mxu0 0
        %268 = vmatpush1.bf16.msra.mxu0 0
        %269 = vmatprep.subr.bf16.mxu0 0
        %270 = vmatpush1.bf16.msra.mxu0 0
        %271 = vmatprep.subr.bf16.mxu0 0
        %272 = vmatpush1.bf16.msra.mxu0 0
        %273 = vmatprep.subr.bf16.mxu0 0
        %274 = vmatpush1.bf16.msra.mxu0 0
        %275 = vmatprep.subr.bf16.mxu0 0
        %276 = vmatpush1.bf16.msra.mxu0 0
        %277 = vmatprep.subr.bf16.mxu0 0
        %278 = vmatpush1.bf16.msra.mxu0 0
        %279 = vmatprep.subr.bf16.mxu0 0
        %280 = vmatpush1.bf16.msra.mxu0 0
        %281 = vmatprep.subr.bf16.mxu0 0
        %282 = vmatpush1.bf16.msra.mxu0 0
        %283 = vmatprep.subr.bf16.mxu0 0
        %284 = vmatpush1.bf16.msra.mxu0 0
        %285 = vmatprep.subr.bf16.mxu0 0
        %286 = vmatpush1.bf16.msra.mxu0 0
        %287 = vmatprep.subr.bf16.mxu0 0
        %288 = vmatpush1.bf16.msra.mxu0 0
        %289 = vmatprep.subr.bf16.mxu0 0
        %290 = vmatpush1.bf16.msra.mxu0 0
        %291 = vmatprep.subr.bf16.mxu0 0
        %292 = vmatpush1.bf16.msra.mxu0 0
        %293 = vmatprep.subr.bf16.mxu0 0
        %294 = vmatpush1.bf16.msra.mxu0 0
        %295 = vmatprep.subr.bf16.mxu0 0
        %296 = vmatpush1.bf16.msra.mxu0 0
        %297 = vmatprep.mubr.bf16.mxu0 0
        %298 = vmatmul.mubr.bf16.gmra.mrb[0].mxu0 %v259
        %v299 = vpop.f32.mrb[0].mxu0
        %v300 = vadd.f32 0.0, %v299
        %v301 = vpop.f32.mrb[0].mxu0
        %v302 = vpop.f32.mrb[0].mxu0
        %v303 = vpop.f32.mrb[0].mxu0
        %304 = vdwg.mxu0
        %v305 = vld [vmem:[%s2] sm:$0x1]
        %v306 = vlaneseq
        %v307 = vshrl.u32 %v306, 7
        %v308 = vsub.s32 0, %v307
        %v309 = vrot.slane %v305, %v308
        %v310 = vmul.f32 %v300, %v309
        %v311 = vld [vmem:[%s2 + $0x1] sm:$0x1]
        %v312 = vlaneseq
        %v313 = vshrl.u32 %v312, 7
        %v314 = vsub.s32 0, %v313
        %v315 = vrot.slane %v311, %v314
        %v316 = vadd.f32 %v310, %v315
        %v317 = vmax.f32 %v316, 0.0
        %v318 = vld [vmem:[%s3] sm:$0x3]
        %v320 = vsel %vm244, %v238, 0
        %vm322 = vcmask 1041408
        %v324 = vsel %vm322, %v318, 0
        %326 = vmatprep.subr.bf16.mxu0 0
        %327 = vmatpush1.bf16.msra.mxu0 %v324
        %328 = vmatprep.subr.bf16.mxu0 0
        %329 = vmatpush1.bf16.msra.mxu0 0
        %330 = vmatprep.subr.bf16.mxu0 0
        %331 = vmatpush1.bf16.msra.mxu0 0
        %332 = vmatprep.subr.bf16.mxu0 0
        %333 = vmatpush1.bf16.msra.mxu0 0
        %334 = vmatprep.subr.bf16.mxu0 0
        %335 = vmatpush1.bf16.msra.mxu0 0
        %336 = vmatprep.subr.bf16.mxu0 0
        %337 = vmatpush1.bf16.msra.mxu0 0
        %338 = vmatprep.subr.bf16.mxu0 0
        %339 = vmatpush1.bf16.msra.mxu0 0
        %340 = vmatprep.subr.bf16.mxu0 0
        %341 = vmatpush1.bf16.msra.mxu0 0
        %342 = vmatprep.subr.bf16.mxu0 0
        %343 = vmatpush1.bf16.msra.mxu0 0
        %344 = vmatprep.subr.bf16.mxu0 0
        %345 = vmatpush1.bf16.msra.mxu0 0
        %346 = vmatprep.subr.bf16.mxu0 0
        %347 = vmatpush1.bf16.msra.mxu0 0
        %348 = vmatprep.subr.bf16.mxu0 0
        %349 = vmatpush1.bf16.msra.mxu0 0
        %350 = vmatprep.subr.bf16.mxu0 0
        %351 = vmatpush1.bf16.msra.mxu0 0
        %352 = vmatprep.subr.bf16.mxu0 0
        %353 = vmatpush1.bf16.msra.mxu0 0
        %354 = vmatprep.subr.bf16.mxu0 0
        %355 = vmatpush1.bf16.msra.mxu0 0
        %356 = vmatprep.subr.bf16.mxu0 0
        %357 = vmatpush1.bf16.msra.mxu0 0
        %358 = vmatprep.mubr.bf16.mxu0 0
        %359 = vmatmul.mubr.bf16.gmra.mrb[0].mxu0 %v320
        %v360 = vpop.f32.mrb[0].mxu0
        %v361 = vadd.f32 0.0, %v360
        %v362 = vpop.f32.mrb[0].mxu0
        %v363 = vpop.f32.mrb[0].mxu0
        %v364 = vpop.f32.mrb[0].mxu0
        %365 = vdwg.mxu0
        %v366 = vadd.f32 %v317, %v361
        %367 = vst.msk [vmem:[%s214] sm:$0xff] %vm248, %v366
        %s368 = sand.u32 %s131, 1
        %s369 = scalar_lea.sflag [#allocation3], %s368
        %s370 = sand.u32 %s131, 1
        %s371 = smul.addr %s370, 8
        %s372 = scalar_lea.vmem [#allocation2], %s371
        // Predicated region
        $region37: #{tpu_custom_call.1} parent=35 // pred_check
          %p373 = pneg %p141
        $region38: #{tpu_custom_call.1} parent=35 // pred_check_branch
          %375 = sbr.rel (%p373) target = $region40
        $region39: #{tpu_custom_call.1} parent=35 // pred_region
          %s377 = ssub.s32 128, 128
          %378 = vsyncadd %s369, %s377
          %s379 = smul.addr %s22, 2
          %s380 = sadd.s32 %s23, %s379
          %s381 = smul.addr %s380, 128
          %s382 = scalar_lea.hbm %s4, %s381
          %s384 = sshll.u32 %s372, 4
          %s385 = int_to_ptr.vmem [resolvable:$true] %s384
          %387 = dma.vmem_to_hbm [thread:$0]  %s385, 128, %s382, %s369
        $region40: #{tpu_custom_call.1} parent=35 // pred_fallthru
          _
      $region36: #{tpu_custom_call.1} parent=5 // pred_fallthru
        _
      %p388 = scmp.le.s32.totalorder 2, %s13
      // Predicated region
      $region41: #{tpu_custom_call.1} parent=5 // pred_check
        %p389 = pneg %p388
      $region42: #{tpu_custom_call.1} parent=5 // pred_check_branch
        %391 = sbr.rel (%p389) target = $region44
      $region43: #{tpu_custom_call.1} parent=5 // pred_region
        %s392 = ssub.s32 %s13, 2
        // Predicated region
        $region45: #{tpu_custom_call.1} parent=43 // pred_check
          %p393 = pneg %p147
        $region46: #{tpu_custom_call.1} parent=43 // pred_check_branch
          %395 = sbr.rel (%p393) target = $region48
        $region47: #{tpu_custom_call.1} parent=43 // pred_region
          %s396 = sand.u32 %s132, 1
          %s397 = scalar_lea.sflag [#allocation3], %s396
          %s398 = sand.u32 %s132, 1
          %s399 = smul.addr %s398, 8
          %s400 = scalar_lea.vmem [#allocation2], %s399
          %401 = dma.done %s397, 128
        $region48: #{tpu_custom_call.1} parent=43 // pred_fallthru
          _
      $region44: #{tpu_custom_call.1} parent=5 // pred_fallthru
        _
    $region6: #{tpu_custom_call.1} parent=1 // loop_footer
      %s17 = sadd.s32 1, %s13
    $region7: #{tpu_custom_call.1} parent=1 // loop_footer_branch
      %12 = sbr.rel target = $region3
    $region8: #{tpu_custom_call.1} parent=1 // loop_exit
      _
    %402 = vsyncpa [#allocation3], 1
    %s403 = scalar_lea.sflag [#allocation3], 1
    %404 = vsyncpa %s403, 1

</llo_original>
